<compile_context>
chip_gen: v6e
topology: v6e:2x2x1
jax: 0.10.0
libtpu: 0.0.40
codegen_flags: <defaults>
</compile_context>

<pallas_src>
import functools
import math

import jax
import jax.numpy as jnp
from jax import lax
from jax.experimental import pallas as pl
from jax.experimental.pallas import tpu as pltpu

LANES = 128
SUBLANES = 8


def _chip_defaults():
    """Return (tile_bytes_per_input, vmem_limit_bytes_or_None, num_cores)."""
    kind = ""
    try:
        kind = jax.devices()[0].device_kind.lower()
    except Exception:  # defensive: fall back to the conservative settings
        pass
    if "v7" in kind or "7x" in kind:
        # 8 MiB/input/tile * 2 inputs * 2 buffers = 32 MiB/TC -> needs a raised
        # scoped-VMEM limit (v7x physical VMEM is 64 MiB per TensorCore).
        return 8 << 20, 48 << 20, 2
    if "v6" in kind:
        # 4 MiB/input/tile -> 16 MiB double-buffered, fits the 32 MiB default.
        return 4 << 20, None, 1
    # v5e / unknown: 2 MiB/input/tile -> 8 MiB, fits the 16 MiB default.
    return 2 << 20, None, 1


def _mse_partial_kernel(p_ref, l_ref, o_ref, *, blocks_per_core, n_blocks, rt, rows):
    """Accumulate sum((pred-label)^2) into a resident (8,128) output block."""
    c = pl.program_id(0)          # core-parallel axis
    k = pl.program_id(1)          # reduction axis ("arbitrary", innermost)
    b = c * blocks_per_core + k   # global row-block index (may be a phantom)

    @pl.when(k == 0)
    def _():
        o_ref[...] = jnp.zeros_like(o_ref)

    d = p_ref[...].astype(jnp.float32) - l_ref[...].astype(jnp.float32)
    sq = d * d

    is_edge = b >= n_blocks - 1   # ragged last block, or phantom (clamped) block

    @pl.when(jnp.logical_not(is_edge))
    def _():
        # (rt,128) -> (rt//8, 8, 128): vreg-aligned, pure elementwise VPU adds;
        # the single cross-lane reduce happens once in the wrapper.
        o_ref[...] += sq.reshape(-1, SUBLANES, LANES).sum(axis=0)

    @pl.when(is_edge)
    def _():
        # Pallas leaves out-of-bounds block regions unspecified and phantom
        # blocks re-read the last real block, so mask by true global row index.
        row_ids = b * rt + lax.broadcasted_iota(jnp.int32, (rt, LANES), 0)
        masked = jnp.where(row_ids < rows, sq, 0.0)
        o_ref[...] += masked.reshape(-1, SUBLANES, LANES).sum(axis=0)


def patchwork_mse(logits, pred, label, scale, *, row_tile=None, num_cores=None):
    """Pallas equivalent of patchwork_MSE.forward. Returns a scalar float32.

    row_tile : rows (of 128 lanes) per grid step; None -> auto (per chip/dtype).
    num_cores: parallel split of the reduction; None -> auto (2 on v7x, else 1).
    """
    del logits, scale  # unused, matching the PyTorch forward
    assert pred.shape == label.shape, "pred/label shape mismatch"

    n_elems = math.prod(pred.shape)
    assert n_elems > 0
    inv_n = 1.0 / n_elems

    # Tiny inputs: a kernel launch is pure overhead (and avoids <8-row blocks).
    if n_elems < SUBLANES * LANES:
        d = pred.astype(jnp.float32).reshape(-1) - label.astype(jnp.float32).reshape(-1)
        return jnp.sum(d * d) * inv_n

    p_flat = pred.reshape(-1)
    l_flat = label.reshape(-1)

    rows = n_elems // LANES        # full 128-lane rows handled by the kernel
    n_main = rows * LANES
    n_tail = n_elems - n_main      # < 128 leftover elements handled in plain jnp

    if n_tail:
        tp = p_flat[n_main:].astype(jnp.float32)
        tl = l_flat[n_main:].astype(jnp.float32)
        tail_sum = jnp.sum((tp - tl) ** 2)
        p2 = p_flat[:n_main].reshape(rows, LANES)
        l2 = l_flat[:n_main].reshape(rows, LANES)
    else:
        tail_sum = jnp.float32(0.0)
        p2 = p_flat.reshape(rows, LANES)   # no pad copy in HBM
        l2 = l_flat.reshape(rows, LANES)

    tile_bytes, vmem_limit, auto_cores = _chip_defaults()
    if num_cores is None:
        num_cores = auto_cores

    itemsize_p = jnp.dtype(pred.dtype).itemsize
    itemsize_l = jnp.dtype(label.dtype).itemsize
    if row_tile is None:
        # Constant bytes per grid step regardless of dtype (bf16 -> 2x rows, ...).
        row_tile = tile_bytes // (LANES * max(itemsize_p, itemsize_l))
    rt = max(SUBLANES, (int(row_tile) // SUBLANES) * SUBLANES)
    # Never use a block taller than the data (rows >= 8 is guaranteed here),
    # keeping block <= array so only the standard ragged-last-block case occurs.
    rt = min(rt, (rows // SUBLANES) * SUBLANES)

    n_blocks = pl.cdiv(rows, rt)
    blocks_per_core = pl.cdiv(n_blocks, num_cores)

    def in_map(c, k):
        b = c * blocks_per_core + k
        # Clamp phantom blocks (b >= n_blocks) onto the last real block so the
        # DMA stays in bounds; the kernel masks their contribution to zero.
        return (jnp.minimum(b, n_blocks - 1), 0)

    kernel = functools.partial(
        _mse_partial_kernel,
        blocks_per_core=blocks_per_core, n_blocks=n_blocks, rt=rt, rows=rows,
    )

    if num_cores > 1:
        # Real cross-TensorCore split (v7x); plain "parallel" barely changes codegen.
        dim_sem = (getattr(pltpu, "CORE_PARALLEL", "parallel"), "arbitrary")
    else:
        dim_sem = ("parallel", "arbitrary")

    cp_kwargs = dict(dimension_semantics=dim_sem)
    if vmem_limit is not None:
        cp_kwargs["vmem_limit_bytes"] = int(vmem_limit)

    cost = pl.CostEstimate(
        flops=3 * n_elems,
        transcendentals=0,
        bytes_accessed=(n_main * itemsize_p + n_main * itemsize_l
                        + num_cores * SUBLANES * LANES * 4),
    )

    partials = pl.pallas_call(
        kernel,
        out_shape=jax.ShapeDtypeStruct((num_cores * SUBLANES, LANES), jnp.float32),
        grid_spec=pltpu.PrefetchScalarGridSpec(
            num_scalar_prefetch=0,
            grid=(num_cores, blocks_per_core),
            in_specs=[
                pl.BlockSpec((rt, LANES), in_map),
                pl.BlockSpec((rt, LANES), in_map),
            ],
            # One resident (8,128) accumulator block per parallel core.
            out_specs=pl.BlockSpec((SUBLANES, LANES), lambda c, k: (c, 0)),
        ),
        compiler_params=pltpu.CompilerParams(**cp_kwargs),
        cost_estimate=cost,
    )(p2, l2)

    # Single tiny cross-lane reduction (num_cores*8*128 f32) + mean normalization.
    return (jnp.sum(partials) + tail_sum) * inv_n


if __name__ == "__main__":
    key = jax.random.PRNGKey(0)
    k1, k2, k3, k4, k5 = jax.random.split(key, 5)

    # --- case 1: NCHW shapes matching the PyTorch module's typical inputs ---
    B, C, H, W = 2, 4, 16, 16
    logits = jax.random.normal(k1, (B, C, H, W), dtype=jnp.float32)  # ignored
    pred = jax.random.normal(k2, (B, C, H, W), dtype=jnp.float32)
    label = jax.random.normal(k3, (B, C, H, W), dtype=jnp.float32)
    scale = jnp.float32(1.0)  # ignored

    loss = jax.block_until_ready(patchwork_mse(logits, pred, label, scale))
    ref = jnp.mean((pred - label) ** 2)
    assert jnp.allclose(loss, ref, rtol=1e-5, atol=1e-6), (loss, ref)

    # --- case 2: unaligned element count (exercises ragged-block mask + jnp tail) ---
    pred2 = jax.random.normal(k4, (3, 5, 7, 11), dtype=jnp.float32)
    label2 = jax.random.normal(k5, (3, 5, 7, 11), dtype=jnp.float32)
    loss2 = jax.block_until_ready(patchwork_mse(None, pred2, label2, None))
    ref2 = jnp.mean((pred2 - label2) ** 2)
    assert jnp.allclose(loss2, ref2, rtol=1e-5, atol=1e-6), (loss2, ref2)

    print("KERNEL_OK")
</pallas_src>

<mosaic_0001>
module attributes {stable_mosaic.version = 11 : i64} {
  func.func @_mse_partial_kernel(%arg0: i32, %arg1: i32, %arg2: memref<16x128xf32, #tpu.memory_space<vmem>>, %arg3: memref<16x128xf32, #tpu.memory_space<vmem>>, %arg4: memref<8x128xf32, #tpu.memory_space<vmem>>) attributes {dimension_semantics = [#tpu.dimension_semantics<parallel>, #tpu.dimension_semantics<arbitrary>], iteration_bounds = array<i64: 1, 1>, scalar_prefetch = 0 : i64, scratch_operands = 0 : i64, tpu.core_type = #tpu.core_type<tc>, window_params = [{transform_indices = @transform_0, window_bounds = array<i64: 16, 128>}, {transform_indices = @transform_1, window_bounds = array<i64: 16, 128>}, {transform_indices = @transform_2, window_bounds = array<i64: 8, 128>}]} {
    %c1_i32 = arith.constant 1 : i32
    %0 = arith.muli %arg0, %c1_i32 : i32
    %1 = arith.addi %0, %arg1 : i32
    %c0_i32 = arith.constant 0 : i32
    %2 = arith.cmpi eq, %arg1, %c0_i32 : i32
    %3 = arith.extui %2 : i1 to i32
    %c0_i32_0 = arith.constant 0 : i32
    %4 = arith.cmpi ne, %3, %c0_i32_0 : i32
    scf.if %4 {
      %cst = arith.constant 0.000000e+00 : f32
      %15 = vector.broadcast %cst : f32 to vector<8x128xf32>
      %c0_7 = arith.constant 0 : index
      %c0_8 = arith.constant 0 : index
      %16 = vector.load %arg4[%c0_7, %c0_8] : memref<8x128xf32, #tpu.memory_space<vmem>>, vector<8x128xf32>
      tpu.vector_store %arg4[%c0_7, %c0_8], %15 {strides = array<i32>} : memref<8x128xf32, #tpu.memory_space<vmem>>, vector<8x128xf32>,
    } else {
    }
    %c0 = arith.constant 0 : index
    %c0_1 = arith.constant 0 : index
    %5 = vector.load %arg2[%c0, %c0_1] : memref<16x128xf32, #tpu.memory_space<vmem>>, vector<16x128xf32>
    %c0_2 = arith.constant 0 : index
    %c0_3 = arith.constant 0 : index
    %6 = vector.load %arg3[%c0_2, %c0_3] : memref<16x128xf32, #tpu.memory_space<vmem>>, vector<16x128xf32>
    %7 = arith.subf %5, %6 : vector<16x128xf32>
    %8 = arith.mulf %7, %7 : vector<16x128xf32>
    %c0_i32_4 = arith.constant 0 : i32
    %9 = arith.cmpi sge, %1, %c0_i32_4 : i32
    %true = arith.constant true
    %10 = arith.xori %9, %true : i1
    %11 = arith.extui %10 : i1 to i32
    %c0_i32_5 = arith.constant 0 : i32
    %12 = arith.cmpi ne, %11, %c0_i32_5 : i32
    scf.if %12 {
      %c0_7 = arith.constant 0 : index
      %c0_8 = arith.constant 0 : index
      %15 = vector.load %arg4[%c0_7, %c0_8] : memref<8x128xf32, #tpu.memory_space<vmem>>, vector<8x128xf32>
      %16 = vector.shape_cast %8 : vector<16x128xf32> to vector<2x8x128xf32>
      %cst = arith.constant dense<0.000000e+00> : vector<8x128xf32>
      %17 = vector.multi_reduction <add>, %16, %cst [0] : vector<2x8x128xf32> to vector<8x128xf32>
      %18 = arith.addf %15, %17 : vector<8x128xf32>
      %c0_9 = arith.constant 0 : index
      %c0_10 = arith.constant 0 : index
      %19 = vector.load %arg4[%c0_9, %c0_10] : memref<8x128xf32, #tpu.memory_space<vmem>>, vector<8x128xf32>
      tpu.vector_store %arg4[%c0_9, %c0_10], %18 {strides = array<i32>} : memref<8x128xf32, #tpu.memory_space<vmem>>, vector<8x128xf32>,
    } else {
    }
    %13 = arith.extui %9 : i1 to i32
    %c0_i32_6 = arith.constant 0 : i32
    %14 = arith.cmpi ne, %13, %c0_i32_6 : i32
    scf.if %14 {
      %c16_i32 = arith.constant 16 : i32
      %15 = arith.muli %1, %c16_i32 : i32
      %16 = tpu.iota {dimensions = array<i32: 0>} : vector<16x128xi32>
      %17 = vector.broadcast %15 : i32 to vector<16x128xi32>
      %18 = arith.addi %17, %16 : vector<16x128xi32>
      %c16_i32_7 = arith.constant 16 : i32
      %19 = vector.broadcast %c16_i32_7 : i32 to vector<16x128xi32>
      %20 = arith.cmpi slt, %18, %19 : vector<16x128xi32>
      %cst = arith.constant 0.000000e+00 : f32
      %21 = vector.broadcast %cst : f32 to vector<16x128xf32>
      %22 = arith.select %20, %8, %21 : vector<16x128xi1>, vector<16x128xf32>
      %c0_8 = arith.constant 0 : index
      %c0_9 = arith.constant 0 : index
      %23 = vector.load %arg4[%c0_8, %c0_9] : memref<8x128xf32, #tpu.memory_space<vmem>>, vector<8x128xf32>
      %24 = vector.shape_cast %22 : vector<16x128xf32> to vector<2x8x128xf32>
      %cst_10 = arith.constant dense<0.000000e+00> : vector<8x128xf32>
      %25 = vector.multi_reduction <add>, %24, %cst_10 [0] : vector<2x8x128xf32> to vector<8x128xf32>
      %26 = arith.addf %23, %25 : vector<8x128xf32>
      %c0_11 = arith.constant 0 : index
      %c0_12 = arith.constant 0 : index
      %27 = vector.load %arg4[%c0_11, %c0_12] : memref<8x128xf32, #tpu.memory_space<vmem>>, vector<8x128xf32>
      tpu.vector_store %arg4[%c0_11, %c0_12], %26 {strides = array<i32>} : memref<8x128xf32, #tpu.memory_space<vmem>>, vector<8x128xf32>,
    } else {
    }
    return
  }
  func.func @transform_0(%arg0: i32, %arg1: i32) -> (i32, i32) {
    %c1_i32 = arith.constant 1 : i32
    %0 = arith.muli %arg0, %c1_i32 : i32
    %1 = arith.addi %0, %arg1 : i32
    %c0_i32 = arith.constant 0 : i32
    %2 = arith.minsi %1, %c0_i32 : i32
    %c0_i32_0 = arith.constant 0 : i32
    %c0_i32_1 = arith.constant 0 : i32
    return %2, %c0_i32_0 : i32, i32
  }
  func.func @transform_1(%arg0: i32, %arg1: i32) -> (i32, i32) {
    %c1_i32 = arith.constant 1 : i32
    %0 = arith.muli %arg0, %c1_i32 : i32
    %1 = arith.addi %0, %arg1 : i32
    %c0_i32 = arith.constant 0 : i32
    %2 = arith.minsi %1, %c0_i32 : i32
    %c0_i32_0 = arith.constant 0 : i32
    %c0_i32_1 = arith.constant 0 : i32
    return %2, %c0_i32_0 : i32, i32
  }
  func.func @transform_2(%arg0: i32, %arg1: i32) -> (i32, i32) {
    %c0_i32 = arith.constant 0 : i32
    %c0_i32_0 = arith.constant 0 : i32
    return %arg0, %c0_i32 : i32, i32
  }
}

</mosaic_0001>

<llo_original>
// kernel: tpu_custom_call.1
$region0: #{tpu_custom_call.1}
  #allocation0 [shape = 'u32[]', space=smem, size = 0x4, offset = 0x4, fixed_abs, tag = 'smem constant byte address 0x4 - core index']
  #allocation1 [shape = 'u32[144,128]{1,0:T(1,128)}', space=vmem, size = 0x12000, scoped, tag = 'internal scratch']
  %s0 = inlined_call_operand.hbm [shape: f32[16,128], index: 0, kind: input, shape index: {}]
  %s1 = inlined_call_operand.hbm [shape: f32[16,128], index: 1, kind: input, shape index: {}]
  %s2 = inlined_call_operand.hbm [shape: f32[8,128], index: 2, kind: output, shape index: {}]
  %s3 = sld [smem:[#allocation0]]
  $region38: #{tpu_custom_call.1} parent=0
    _
  %s5 = ssub.s32 1, %s3
  %s6 = scalar_select 0, %s5, %s3
  $region1: #{tpu_custom_call.1} parent=0
    #allocation2 [shape = 'u8[8192]{0}', space=vmem, size = 0x2000, scoped, tag = 'input window, operand 0, single buffered']
    #allocation3 [shape = 's32[1]{0}', space=sflag, size = 0x4, scoped, tag = 'scoped memory for tpu_custom_call.1']
    #allocation4 [shape = 's32[1]{0}', space=sflag, size = 0x4, scoped, tag = 'scoped memory for tpu_custom_call.1']
    #allocation5 [shape = 'u8[8192]{0}', space=vmem, size = 0x2000, scoped, tag = 'input window, operand 1, single buffered']
    #allocation6 [shape = 's32[1]{0}', space=sflag, size = 0x4, scoped, tag = 'scoped memory for tpu_custom_call.1']
    #allocation7 [shape = 'u8[4096]{0}', space=vmem, size = 0x1000, scoped, tag = 'output window, operand 0, single buffered']
    %7 = vsyncpa [#allocation3], 0
    %8 = vsyncpa [#allocation6], 0
    %9 = vsyncpa [#allocation4], 0
    // Predicated region
    $region2: #{tpu_custom_call.1} parent=1 // pred_check
      _
    $region3: #{tpu_custom_call.1} parent=1 // pred_check_branch
      %11 = sbr.rel (0) target = $region5
    $region4: #{tpu_custom_call.1} parent=1 // pred_region
      %s12 = sadd.s32 0, 0
      %p13 = scmp.lt.s32.totalorder %s12, 0
      %s14 = scalar_select %p13, %s12, 0
      %s15 = smul.u32 2, %s14
      %s17 = ssub.s32 256, 256
      %18 = vsyncadd [#allocation3], %s17
      %s19 = smul.addr %s15, 128
      %s20 = scalar_lea.hbm %s0, %s19
      %s21 = sshll.u32 [#allocation2], 4
      %s22 = int_to_ptr.vmem [resolvable:$true] %s21
      %27 = dma.hbm_to_vmem [thread:$0]  %s20, 256, %s22, [#allocation3], 128, 128, 8
    $region5: #{tpu_custom_call.1} parent=1 // pred_fallthru
      _
    // Predicated region
    $region6: #{tpu_custom_call.1} parent=1 // pred_check
      _
    $region7: #{tpu_custom_call.1} parent=1 // pred_check_branch
      %29 = sbr.rel (0) target = $region9
    $region8: #{tpu_custom_call.1} parent=1 // pred_region
      %s30 = sadd.s32 0, 0
      %p31 = scmp.lt.s32.totalorder %s30, 0
      %s32 = scalar_select %p31, %s30, 0
      %s33 = smul.u32 2, %s32
      %s35 = ssub.s32 256, 256
      %36 = vsyncadd [#allocation6], %s35
      %s37 = smul.addr %s33, 128
      %s38 = scalar_lea.hbm %s1, %s37
      %s39 = sshll.u32 [#allocation5], 4
      %s40 = int_to_ptr.vmem [resolvable:$true] %s39
      %45 = dma.hbm_to_vmem [thread:$0]  %s38, 256, %s40, [#allocation6], 128, 128, 8
    $region9: #{tpu_custom_call.1} parent=1 // pred_fallthru
      _
    // Predicated region
    $region10: #{tpu_custom_call.1} parent=1 // pred_check
      _
    $region11: #{tpu_custom_call.1} parent=1 // pred_check_branch
      %47 = sbr.rel (0) target = $region13
    $region12: #{tpu_custom_call.1} parent=1 // pred_region
      %48 = dma.done [#allocation3], 256
    $region13: #{tpu_custom_call.1} parent=1 // pred_fallthru
      _
    // Predicated region
    $region14: #{tpu_custom_call.1} parent=1 // pred_check
      _
    $region15: #{tpu_custom_call.1} parent=1 // pred_check_branch
      %50 = sbr.rel (0) target = $region17
    $region16: #{tpu_custom_call.1} parent=1 // pred_region
      %51 = dma.done [#allocation6], 256
    $region17: #{tpu_custom_call.1} parent=1 // pred_fallthru
      _
    %s52 = sadd.s32 0, 0
    %p53 = scmp.lt.s32.totalorder %s52, 0
    %s54 = scalar_select %p53, %s52, 0
    %s55 = smul.u32 2, %s54
    %s56 = sadd.s32 0, 0
    %p57 = scmp.lt.s32.totalorder %s56, 0
    %s58 = scalar_select %p57, %s56, 0
    %s59 = smul.u32 2, %s58
    %s60 = sadd.s32 0, 0
    %p61 = scmp.eq.s32.totalorder 0, 0
    // Predicated region
    $region18: #{tpu_custom_call.1} parent=1 // pred_check
      %p62 = pneg %p61
    $region19: #{tpu_custom_call.1} parent=1 // pred_check_branch
      %64 = sbr.rel (%p62) target = $region21
    $region20: #{tpu_custom_call.1} parent=1 // pred_region
      %65 = vst [vmem:[#allocation7] sm:$0xff] 0.0
    $region21: #{tpu_custom_call.1} parent=1 // pred_fallthru
      _
    %v66 = vld [vmem:[#allocation2] sm:$0xff]
    %v67 = vld [vmem:[#allocation2 + $0x8] sm:$0xff]
    %v68 = vld [vmem:[#allocation5] sm:$0xff]
    %v69 = vld [vmem:[#allocation5 + $0x8] sm:$0xff]
    %v70 = vsub.f32 %v66, %v68
    %v71 = vsub.f32 %v67, %v69
    %v72 = vmul.f32 %v70, %v70
    %v73 = vmul.f32 %v71, %v71
    %p74 = scmp.ge.s32.totalorder %s60, 0
    %p75 = scmp.lt.s32.totalorder %s60, 0
    // Predicated region
    $region22: #{tpu_custom_call.1} parent=1 // pred_check
      %p76 = pneg %p75
    $region23: #{tpu_custom_call.1} parent=1 // pred_check_branch
      %78 = sbr.rel (%p76) target = $region25
    $region24: #{tpu_custom_call.1} parent=1 // pred_region
      %v79 = vld [vmem:[#allocation7] sm:$0xff]
      %v80 = vadd.f32 %v72, %v73
      %v81 = vadd.f32 %v79, %v80
      %82 = vst [vmem:[#allocation7] sm:$0xff] %v81
    $region25: #{tpu_custom_call.1} parent=1 // pred_fallthru
      _
    // Predicated region
    $region26: #{tpu_custom_call.1} parent=1 // pred_check
      %p83 = pneg %p74
    $region27: #{tpu_custom_call.1} parent=1 // pred_check_branch
      %85 = sbr.rel (%p83) target = $region29
    $region28: #{tpu_custom_call.1} parent=1 // pred_region
      %s86 = smul.u32 %s60, 16
      %v87 = vlaneseq
      %v88 = vshrl.u32 %v87, 7
      %v89 = vadd.s32 %v88, 8
      %v90 = vstv %s86
      %v91 = vadd.s32 %v90, %v88
      %v92 = vadd.s32 %v90, %v89
      %vm93 = vcmp.lt.s32.totalorder %v91, 16
      %vm94 = vcmp.lt.s32.totalorder %v92, 16
      %v95 = vsel %vm93, %v72, 0.0
      %v96 = vsel %vm94, %v73, 0.0
      %v97 = vld [vmem:[#allocation7] sm:$0xff]
      %v98 = vadd.f32 %v95, %v96
      %v99 = vadd.f32 %v97, %v98
      %100 = vst [vmem:[#allocation7] sm:$0xff] %v99
    $region29: #{tpu_custom_call.1} parent=1 // pred_fallthru
      _
    // Predicated region
    $region30: #{tpu_custom_call.1} parent=1 // pred_check
      _
    $region31: #{tpu_custom_call.1} parent=1 // pred_check_branch
      %102 = sbr.rel (0) target = $region33
    $region32: #{tpu_custom_call.1} parent=1 // pred_region
      %s104 = ssub.s32 128, 128
      %105 = vsyncadd [#allocation4], %s104
      %s107 = sshll.u32 [#allocation7], 4
      %s108 = int_to_ptr.vmem [resolvable:$true] %s107
      %110 = dma.vmem_to_hbm [thread:$0]  %s108, 128, %s2, [#allocation4]
    $region33: #{tpu_custom_call.1} parent=1 // pred_fallthru
      _
    // Predicated region
    $region34: #{tpu_custom_call.1} parent=1 // pred_check
      _
    $region35: #{tpu_custom_call.1} parent=1 // pred_check_branch
      %112 = sbr.rel (0) target = $region37
    $region36: #{tpu_custom_call.1} parent=1 // pred_region
      %113 = dma.done [#allocation4], 128
    $region37: #{tpu_custom_call.1} parent=1 // pred_fallthru
      _
    %114 = vsyncpa [#allocation3], 1
    %115 = vsyncpa [#allocation6], 1
    %116 = vsyncpa [#allocation4], 1

</llo_original>
